<compile_context>
chip_gen: v7x
topology: tpu7x:2x2x1
jax: 0.10.0
libtpu: 0.0.40
codegen_flags: <defaults>
</compile_context>

<pallas_src>
import jax
import jax.numpy as jnp
from jax import lax
from jax.experimental import pallas as pl
from jax.experimental.pallas import tpu as pltpu


# ----------------------------------------------------------------------------
# shared per-(batch, column-tile) body
# ----------------------------------------------------------------------------
def _affinity_apply_tile(f_ref, pred_ref, out_ref, *, tk, compute_dtype):
    """out_tile_j = column-normalized (pred @ relu(f^T f))[:, j-th column tile].

    f_ref:    (Cout, Lp)     L2-normalized conv features (VMEM scratch or input)
    pred_ref: (C1+1, Lp)     pred with an appended all-ones row (col-sum trick)
    out_ref:  (C1, TJ)       column tile j of the output

    The affinity is built in (TK, TJ) row chunks; each chunk is relu'd, cast to
    `compute_dtype`, and immediately contracted against the matching pred row
    chunk into an f32 accumulator.  The ones row of pred_ref accumulates the
    column sums of the relu'd affinity for free on the MXU.
    """
    j = pl.program_id(1)
    c1_aug, lp = pred_ref.shape
    tj = out_ref.shape[-1]
    approx = jnp.dtype(compute_dtype) != jnp.dtype(jnp.float32)

    col = pl.multiple_of(j * tj, tj)
    f_cols = f_ref[:, pl.ds(col, tj)].astype(compute_dtype)            # (Cout, TJ)

    def chunk(k, acc):
        row = pl.multiple_of(k * tk, tk)
        f_rows = f_ref[:, pl.ds(row, tk)].astype(compute_dtype)        # (Cout, TK)
        # contraction over dim 0 of BOTH operands -> no f.T relayout before MXU
        aff = lax.dot_general(
            f_rows, f_cols,
            dimension_numbers=(((0,), (0,)), ((), ())),
            preferred_element_type=jnp.float32)                        # (TK, TJ)
        aff = jnp.maximum(aff, 0.0).astype(compute_dtype)
        p = pred_ref[:, pl.ds(row, tk)].astype(compute_dtype)          # (C1+1, TK)
        return acc + jnp.dot(p, aff, preferred_element_type=jnp.float32)

    acc = lax.fori_loop(0, lp // tk, chunk,
                        jnp.zeros((c1_aug, tj), jnp.float32))          # (C1+1, TJ)

    col_sum = acc[c1_aug - 1:c1_aug, :]                                # (1, TJ)
    # normalization folded onto the tiny (C1, TJ) output, not the slab;
    # EUP approx reciprocal in bf16 mode (free slot), exact in f32 mode.
    out = acc[:c1_aug - 1, :] * pl.reciprocal(col_sum + 1e-5, approx=bool(approx))
    out_ref[...] = out.astype(out_ref.dtype)


def _fused_kernel(tk, compute_dtype):
    """General path (N >= 2): 1x1 conv + L2 norm computed once per batch
    element at j == 0, persisted in VMEM scratch across column tiles."""
    def kernel(w_ref, fea_ref, pred_ref, out_ref, f_ref):
        @pl.when(pl.program_id(1) == 0)
        def _():
            w = w_ref[...].astype(jnp.float32)                         # (Cout, C)
            fea = fea_ref[...].astype(jnp.float32)                     # (C, Lp)
            f = jnp.dot(w, fea, preferred_element_type=jnp.float32)    # (Cout, Lp)
            norm = jnp.sqrt(jnp.sum(f * f, axis=0, keepdims=True))     # (1, Lp)
            # exact reciprocal: keeps the f32 path within ~1e-5 of torch
            f_ref[...] = (f * pl.reciprocal(norm + 1e-5, approx=False)
                          ).astype(f_ref.dtype)

        _affinity_apply_tile(f_ref, pred_ref, out_ref,
                             tk=tk, compute_dtype=compute_dtype)
    return kernel


def _precomputed_kernel(tk, compute_dtype):
    """N == 1 path: f is precomputed in the wrapper (tiny XLA GEMM); no scratch,
    no fea/weight DMA, both grid axes fully parallel (keeps both v7x TCs busy)."""
    def kernel(f_ref, pred_ref, out_ref):
        _affinity_apply_tile(f_ref, pred_ref, out_ref,
                             tk=tk, compute_dtype=compute_dtype)
    return kernel


# ----------------------------------------------------------------------------
# generation-aware budgets & tile selection
# ----------------------------------------------------------------------------
def _tpu_budgets():
    """(affinity-slab budget bytes, vmem_limit cap bytes), per TPU generation."""
    vmem_cap = 128 * 2**20
    try:
        info = pltpu.get_tpu_info()
        cap = getattr(info, "vmem_capacity_bytes", None)
        if cap:
            vmem_cap = int(cap)
    except Exception:
        pass
    if vmem_cap <= 64 * 2**20:           # v7x-class: leave compiler headroom
        return 4 * 2**20, 48 * 2**20
    return 16 * 2**20, 100 * 2**20       # v5e / v6e: 128 MiB physical


def _pick_tiles(L, slab_budget_bytes):
    """Pick the affinity chunk size TILE (= TK = TJ) and the padded length Lp.

    TILE is lane-aligned (multiple of 128, >=256 when possible for the v6e/v7x
    256-wide MXU), divides Lp, and keeps the f32 chunk TILE*TILE*4 <= budget.
    """
    cap = max(128, int((slab_budget_bytes // 4) ** 0.5) // 128 * 128)
    base = -(-L // 128) * 128            # L rounded up to a lane multiple
    if base <= cap:
        return base, base
    m = base // 128
    for d in range(cap // 128, 0, -1):   # largest 128-multiple divisor <= cap
        if m % d == 0:
            return d * 128, base
    tile = cap                           # unreachable (d == 1 always divides)
    return tile, -(-L // tile) * tile


# ----------------------------------------------------------------------------
# wrapper
# ----------------------------------------------------------------------------
def spatial_refine(pred, fea, weight, *, compute_dtype=jnp.bfloat16, tile=None):
    """pred: (N, C1, H1, W1), fea: (N, C, H, W) with H1*W1 == H*W,
    weight: (Cout, C) or (Cout, C, 1, 1) — the bias-free 1x1 conv weight."""
    n, c, h, w = fea.shape
    n2, c1, h1, w1 = pred.shape
    assert n == n2 and h1 * w1 == h * w, "pred spatial size must match fea"
    if weight.ndim == 4:                               # (Cout, C, 1, 1) -> (Cout, C)
        weight = weight.reshape(weight.shape[0], weight.shape[1])
    cout = weight.shape[0]
    L = h * w

    slab_budget, vmem_cap = _tpu_budgets()
    if tile is None:
        tile, lp = _pick_tiles(L, slab_budget)
    else:
        assert tile % 128 == 0
        lp = -(-L // tile) * tile
    tj = tk = tile

    fea_m = fea.reshape(n, c, L)
    pred_m = pred.reshape(n, c1, L)
    # ones row appended -> column sums of relu(f^T f) fall out of the MXU matmul
    pred_aug = jnp.concatenate(
        [pred_m, jnp.ones((n, 1, L), pred_m.dtype)], axis=1)           # (N, C1+1, L)
    if lp != L:
        # zero-padded columns of fea give zero f columns -> zero affinity rows /
        # columns -> zero (then sliced-away) output columns; exact.
        pad = ((0, 0), (0, 0), (0, lp - L))
        fea_m = jnp.pad(fea_m, pad)
        pred_aug = jnp.pad(pred_aug, pad)

    cdt = jnp.dtype(compute_dtype)
    use_precomputed_f = n < 2            # j-parallel path (v7x 2-TC) when batch can't fill cores

    # VMEM estimate (double-buffered pipelined operands + scratch + live chunk)
    est = (4 * 2 * (c1 + 1) * lp                 # pred_aug double buffer
           + 4 * 2 * c1 * tj                     # out double buffer
           + 4 * tk * tj + cdt.itemsize * tk * tj  # f32 aff chunk + cast copy
           + 4 * (c1 + 1) * tj)                  # accumulator
    if use_precomputed_f:
        est += 2 * cdt.itemsize * cout * lp      # f input double buffer
    else:
        est += 4 * (2 * cout * c + 2 * c * lp) + cdt.itemsize * cout * lp
    vmem_limit = int(min(vmem_cap, max(2 * est + (8 << 20), 32 << 20)))

    cost = pl.CostEstimate(
        flops=2 * n * lp * lp * (cout + c1 + 1) + 2 * n * cout * c * lp,
        transcendentals=2 * n * lp,
        bytes_accessed=4 * (cout * c + n * lp * (c + cout + 2 * (c1 + 1))),
    )

    grid = (n, lp // tj)
    out_spec = pl.BlockSpec((None, c1, tj), lambda b, j: (b, 0, j))

    if use_precomputed_f:
        # tiny XLA GEMM + normalize; the kernel then only streams f and pred
        f = jnp.einsum("oc,ncl->nol", weight.astype(jnp.float32),
                       fea_m.astype(jnp.float32))
        f = f * (1.0 / (jnp.sqrt(jnp.sum(f * f, axis=1, keepdims=True)) + 1e-5))
        f = f.astype(compute_dtype)
        out = pl.pallas_call(
            _precomputed_kernel(tk=tk, compute_dtype=compute_dtype),
            out_shape=jax.ShapeDtypeStruct((n, c1, lp), pred.dtype),
            grid=grid,
            in_specs=[
                pl.BlockSpec((None, cout, lp), lambda b, j: (b, 0, 0)),     # f
                pl.BlockSpec((None, c1 + 1, lp), lambda b, j: (b, 0, 0)),   # pred_aug
            ],
            out_specs=out_spec,
            compiler_params=pltpu.CompilerParams(
                dimension_semantics=("parallel", "parallel"),
                vmem_limit_bytes=vmem_limit),
            cost_estimate=cost,
        )(f, pred_aug)
    else:
        out = pl.pallas_call(
            _fused_kernel(tk=tk, compute_dtype=compute_dtype),
            out_shape=jax.ShapeDtypeStruct((n, c1, lp), pred.dtype),
            grid=grid,
            in_specs=[
                pl.BlockSpec((cout, c), lambda b, j: (0, 0)),               # weight
                pl.BlockSpec((None, c, lp), lambda b, j: (b, 0, 0)),        # fea
                pl.BlockSpec((None, c1 + 1, lp), lambda b, j: (b, 0, 0)),   # pred_aug
            ],
            out_specs=out_spec,
            scratch_shapes=[pltpu.VMEM((cout, lp), compute_dtype)],         # normalized f
            compiler_params=pltpu.CompilerParams(
                dimension_semantics=("parallel", "arbitrary"),
                vmem_limit_bytes=vmem_limit),
            cost_estimate=cost,
        )(weight, fea_m, pred_aug)

    if lp != L:
        out = out[:, :, :L]
    return out.reshape(n, c1, h, w)


# ----------------------------------------------------------------------------
# pure-JAX reference (mirrors the PyTorch forward)
# ----------------------------------------------------------------------------
def _reference(pred, fea, weight):
    n, c, h, w = fea.shape
    c1 = pred.shape[1]
    L = h * w
    f = jnp.einsum("oc,ncl->nol", weight, fea.reshape(n, c, L))
    f = f / (jnp.linalg.norm(f, axis=1, keepdims=True) + 1e-5)
    aff = jnp.maximum(jnp.einsum("nol,nom->nlm", f, f), 0.0)
    aff = aff / (jnp.sum(aff, axis=1, keepdims=True) + 1e-5)
    out = jnp.einsum("ncl,nlm->ncm", pred.reshape(n, c1, L), aff)
    return out.reshape(n, c1, h, w)


if __name__ == "__main__":
    key = jax.random.PRNGKey(0)
    k_fea, k_pred, k_w = jax.random.split(key, 3)

    N, C_IN, C_OUT, C_PRED, H, W = 2, 4, 4, 4, 16, 16

    fea = jax.random.normal(k_fea, (N, C_IN, H, W), dtype=jnp.float32)
    pred = jax.random.normal(k_pred, (N, C_PRED, H, W), dtype=jnp.float32)
    weight = 0.1 * jax.random.normal(k_w, (C_OUT, C_IN), dtype=jnp.float32)

    ref = _reference(pred, fea, weight)

    # exact f32 path, forced small tile -> 2 column tiles x 2 row chunks
    # (exercises scratch persistence, chunked accumulation, ones-row col-sum)
    out_f32 = jax.block_until_ready(
        spatial_refine(pred, fea, weight, compute_dtype=jnp.float32, tile=128))
    assert out_f32.shape == (N, C_PRED, H, W)
    assert jnp.allclose(out_f32, ref, atol=1e-4, rtol=1e-4), "f32 tiled mismatch"

    # default bf16 MXU path, auto tile selection (single 256-wide tile here)
    out_bf16 = jax.block_until_ready(spatial_refine(pred, fea, weight))
    assert jnp.allclose(out_bf16, ref, atol=2e-2, rtol=2e-2), "bf16 mismatch"

    # N == 1 -> precomputed-f, fully parallel grid (v7x 2-TC path)
    out_n1 = jax.block_until_ready(
        spatial_refine(pred[:1], fea[:1], weight,
                       compute_dtype=jnp.float32, tile=128))
    assert jnp.allclose(out_n1, ref[:1], atol=1e-4, rtol=1e-4), "N=1 mismatch"

    # non-lane-aligned spatial size -> L zero-padded to 128 inside the wrapper
    fea_s = jax.random.normal(k_fea, (N, C_IN, 10, 10), dtype=jnp.float32)
    pred_s = jax.random.normal(k_pred, (N, C_PRED, 10, 10), dtype=jnp.float32)
    ref_s = _reference(pred_s, fea_s, weight)
    out_s = jax.block_until_ready(
        spatial_refine(pred_s, fea_s, weight, compute_dtype=jnp.float32))
    assert jnp.allclose(out_s, ref_s, atol=1e-4, rtol=1e-4), "padded-L mismatch"

    print("KERNEL_OK")
</pallas_src>

<mosaic_0001>
module attributes {stable_mosaic.version = 11 : i64} {
  func.func @kernel(%arg0: i32, %arg1: i32, %arg2: memref<4x4xf32, #tpu.memory_space<vmem>>, %arg3: memref<1x4x256xf32, #tpu.memory_space<vmem>>, %arg4: memref<1x5x256xf32, #tpu.memory_space<vmem>>, %arg5: memref<1x4x128xf32, #tpu.memory_space<vmem>>, %arg6: memref<4x256xf32, #tpu.memory_space<vmem>>) attributes {dimension_semantics = [#tpu.dimension_semantics<parallel>, #tpu.dimension_semantics<arbitrary>], iteration_bounds = array<i64: 2, 2>, scalar_prefetch = 0 : i64, scratch_operands = 1 : i64, tpu.core_type = #tpu.core_type<tc>, window_params = [{pipeline_mode = #tpu.pipeline_mode<synchronous>, transform_indices = @transform_0, window_bounds = array<i64: 4, 4>}, {transform_indices = @transform_1, window_bounds = array<i64: 1, 4, 256>}, {transform_indices = @transform_2, window_bounds = array<i64: 1, 5, 256>}, {transform_indices = @transform_3, window_bounds = array<i64: 1, 4, 128>}]} {
    %c0_i32 = arith.constant 0 : i32
    %0 = arith.cmpi eq, %arg1, %c0_i32 : i32
    %1 = arith.extui %0 : i1 to i32
    %c0_i32_0 = arith.constant 0 : i32
    %2 = arith.cmpi ne, %1, %c0_i32_0 : i32
    scf.if %2 {
      %c0_7 = arith.constant 0 : index
      %c0_8 = arith.constant 0 : index
      %20 = vector.load %arg2[%c0_7, %c0_8] : memref<4x4xf32, #tpu.memory_space<vmem>>, vector<4x4xf32>
      %c0_9 = arith.constant 0 : index
      %c0_10 = arith.constant 0 : index
      %c0_11 = arith.constant 0 : index
      %21 = vector.load %arg3[%c0_9, %c0_10, %c0_11] : memref<1x4x256xf32, #tpu.memory_space<vmem>>, vector<1x4x256xf32>
      %22 = vector.shape_cast %21 : vector<1x4x256xf32> to vector<4x256xf32>
      %cst_12 = arith.constant dense<0.000000e+00> : vector<4x256xf32>
      %23 = tpu.matmul %20, %22, %cst_12 {dimension_numbers = #tpu.dot_dimension_numbers<[1], [0], [0], [1], [0, 0, 1, 1], [], []>} : vector<4x4xf32>, vector<4x256xf32>, vector<4x256xf32> -> vector<4x256xf32>
      %24 = arith.mulf %23, %23 : vector<4x256xf32>
      %cst_13 = arith.constant dense<0.000000e+00> : vector<256xf32>
      %25 = vector.multi_reduction <add>, %24, %cst_13 [0] : vector<4x256xf32> to vector<256xf32>
      %26 = vector.shape_cast %25 : vector<256xf32> to vector<1x256xf32>
      %27 = math.sqrt %26 : vector<1x256xf32>
      %cst_14 = arith.constant 9.99999974E-6 : f32
      %28 = vector.broadcast %cst_14 : f32 to vector<1x256xf32>
      %29 = arith.addf %27, %28 : vector<1x256xf32>
      %30 = tpu.reciprocal %29 : vector<1x256xf32> -> vector<1x256xf32>
      %31 = vector.broadcast %30 : vector<1x256xf32> to vector<4x256xf32>
      %32 = arith.mulf %23, %31 : vector<4x256xf32>
      %c0_15 = arith.constant 0 : index
      %c0_16 = arith.constant 0 : index
      %33 = vector.load %arg6[%c0_15, %c0_16] : memref<4x256xf32, #tpu.memory_space<vmem>>, vector<4x256xf32>
      tpu.vector_store %arg6[%c0_15, %c0_16], %32 {strides = array<i32>} : memref<4x256xf32, #tpu.memory_space<vmem>>, vector<4x256xf32>,
    } else {
    }
    %c128_i32 = arith.constant 128 : i32
    %3 = arith.muli %arg1, %c128_i32 : i32
    %4 = tpu.assume_multiple %3, 128 : i32
    %c0 = arith.constant 0 : index
    %5 = arith.index_cast %4 : i32 to index
    %6 = vector.load %arg6[%c0, %5] : memref<4x256xf32, #tpu.memory_space<vmem>>, vector<4x128xf32>
    %cst = arith.constant 0.000000e+00 : f32
    %7 = vector.broadcast %cst : f32 to vector<5x128xf32>
    %c0_i32_1 = arith.constant 0 : i32
    %c2_i32 = arith.constant 2 : i32
    %8 = arith.addi %c0_i32_1, %c2_i32 : i32
    %c1_i32 = arith.constant 1 : i32
    %9 = scf.for %arg7 = %c0_i32_1 to %8 step %c1_i32 iter_args(%arg8 = %7) -> (vector<5x128xf32>)  : i32 {
      %c128_i32_7 = arith.constant 128 : i32
      %20 = arith.muli %arg7, %c128_i32_7 : i32
      %21 = tpu.assume_multiple %20, 128 : i32
      %c0_8 = arith.constant 0 : index
      %22 = arith.index_cast %21 : i32 to index
      %23 = vector.load %arg6[%c0_8, %22] : memref<4x256xf32, #tpu.memory_space<vmem>>, vector<4x128xf32>
      %cst_9 = arith.constant dense<0.000000e+00> : vector<128x128xf32>
      %24 = tpu.matmul %23, %6, %cst_9 {dimension_numbers = #tpu.dot_dimension_numbers<[0], [0], [1], [1], [0, 1, 1, 1], [], []>} : vector<4x128xf32>, vector<4x128xf32>, vector<128x128xf32> -> vector<128x128xf32>
      %cst_10 = arith.constant 0.000000e+00 : f32
      %25 = vector.broadcast %cst_10 : f32 to vector<128x128xf32>
      %26 = arith.maximumf %24, %25 : vector<128x128xf32>
      %c0_11 = arith.constant 0 : index
      %c0_12 = arith.constant 0 : index
      %27 = arith.index_cast %21 : i32 to index
      %28 = vector.load %arg4[%c0_11, %c0_12, %27] : memref<1x5x256xf32, #tpu.memory_space<vmem>>, vector<1x5x128xf32>
      %29 = vector.shape_cast %28 : vector<1x5x128xf32> to vector<5x128xf32>
      %cst_13 = arith.constant dense<0.000000e+00> : vector<5x128xf32>
      %30 = tpu.matmul %29, %26, %cst_13 {dimension_numbers = #tpu.dot_dimension_numbers<[1], [0], [0], [1], [0, 0, 1, 1], [], []>} : vector<5x128xf32>, vector<128x128xf32>, vector<5x128xf32> -> vector<5x128xf32>
      %31 = arith.addf %arg8, %30 : vector<5x128xf32>
      scf.yield %31 : vector<5x128xf32>
    }
    %c2_i32_2 = arith.constant 2 : i32
    %10 = vector.extract_strided_slice %9 {offsets = [4, 0], sizes = [1, 128], strides = [1, 1]} : vector<5x128xf32> to vector<1x128xf32>
    %11 = vector.extract_strided_slice %9 {offsets = [0, 0], sizes = [4, 128], strides = [1, 1]} : vector<5x128xf32> to vector<4x128xf32>
    %cst_3 = arith.constant 9.99999974E-6 : f32
    %12 = vector.broadcast %cst_3 : f32 to vector<1x128xf32>
    %13 = arith.addf %10, %12 : vector<1x128xf32>
    %14 = tpu.reciprocal %13 : vector<1x128xf32> -> vector<1x128xf32>
    %15 = vector.broadcast %14 : vector<1x128xf32> to vector<4x128xf32>
    %16 = arith.mulf %11, %15 : vector<4x128xf32>
    %c0_4 = arith.constant 0 : index
    %c0_5 = arith.constant 0 : index
    %c0_6 = arith.constant 0 : index
    %17 = vector.load %arg5[%c0_4, %c0_5, %c0_6] : memref<1x4x128xf32, #tpu.memory_space<vmem>>, vector<1x4x128xf32>
    %18 = vector.shape_cast %17 : vector<1x4x128xf32> to vector<4x128xf32>
    %19 = vector.shape_cast %16 : vector<4x128xf32> to vector<1x4x128xf32>
    tpu.vector_store %arg5[%c0_4, %c0_5, %c0_6], %19 {strides = array<i32>} : memref<1x4x128xf32, #tpu.memory_space<vmem>>, vector<1x4x128xf32>,
    return
  }
  func.func @transform_0(%arg0: i32, %arg1: i32) -> (i32, i32) {
    %c0_i32 = arith.constant 0 : i32
    %c0_i32_0 = arith.constant 0 : i32
    %c0_i32_1 = arith.constant 0 : i32
    return %c0_i32, %c0_i32_0 : i32, i32
  }
  func.func @transform_1(%arg0: i32, %arg1: i32) -> (i32, i32, i32) {
    %c0_i32 = arith.constant 0 : i32
    %c0_i32_0 = arith.constant 0 : i32
    %c0_i32_1 = arith.constant 0 : i32
    return %arg0, %c0_i32, %c0_i32_0 : i32, i32, i32
  }
  func.func @transform_2(%arg0: i32, %arg1: i32) -> (i32, i32, i32) {
    %c0_i32 = arith.constant 0 : i32
    %c0_i32_0 = arith.constant 0 : i32
    %c0_i32_1 = arith.constant 0 : i32
    return %arg0, %c0_i32, %c0_i32_0 : i32, i32, i32
  }
  func.func @transform_3(%arg0: i32, %arg1: i32) -> (i32, i32, i32) {
    %c0_i32 = arith.constant 0 : i32
    %c0_i32_0 = arith.constant 0 : i32
    return %arg0, %c0_i32, %arg1 : i32, i32, i32
  }
}

</mosaic_0001>

<llo_original>
// kernel: tpu_custom_call.1
$region0: #{tpu_custom_call.1}
  #allocation0 [shape = 'u32[]', space=smem, size = 0x4, offset = 0x4, fixed_abs, tag = 'smem constant byte address 0x4 - core index']
  #allocation1 [shape = 'u32[144,128]{1,0:T(1,128)}', space=vmem, size = 0x12000, scoped, tag = 'internal scratch']
  #allocation2 [shape = 'f32[4,256]{1,0:T(4,128)}', space=vmem, size = 0x1000, scoped, tag = 'scratch operand']
  %s0 = inlined_call_operand.vmem [shape: f32[4,4], index: 0, kind: input, shape index: {}]
  %s1 = inlined_call_operand.vmem [shape: f32[2,4,256], index: 1, kind: input, shape index: {}]
  %s2 = inlined_call_operand.vmem [shape: f32[2,5,256], index: 2, kind: input, shape index: {}]
  %s3 = inlined_call_operand.hbm [shape: f32[2,4,256], index: 3, kind: output, shape index: {}]
  %s4 = sld [smem:[#allocation0]]
  $region56: #{tpu_custom_call.1} parent=0
    _
  %s6 = ssub.s32 1, %s4
  %s7 = scalar_select 0, %s6, %s4
  $region1: #{tpu_custom_call.1} parent=0
    #allocation3 [shape = 'u8[4096]{0}', space=vmem, size = 0x1000, scoped, tag = 'output window, operand 0']
    #allocation4 [shape = 's32[2]{0}', space=sflag, size = 0x8, scoped, tag = 'scoped memory for tpu_custom_call.1']
    %8 = vsyncpa [#allocation4], 0
    %s9 = scalar_lea.sflag [#allocation4], 1
    %10 = vsyncpa %s9, 0
    loop: start=0, step=1, limit=6
    $region2: #{tpu_custom_call.1} parent=1 // loop_pre_header
      _
    $region3: #{tpu_custom_call.1} parent=1 // loop_header
      %s12 = sphi 0, %s16
      %p13 = scmp.ge.s32.totalorder %s12, 6
      %s19 = sphi 0, %s31
      %s20 = sphi 0, %s27
      %s21 = sphi 0, %s19
      %s22 = sphi 0, %s20
      %s23 = sphi 0, %s21
      %s24 = sphi 0, %s22
      %s32 = sphi 0, %s32
      %s34 = sphi 0, %s32
      %s35 = sphi 0, %s34
      %s49 = sphi 0, %s35
      %s55 = sphi 0, %s57
      %s58 = sphi 0, %s55
      %s59 = sphi 0, %s58
      %s75 = sphi 0, %s59
      %s81 = sphi 0, %s83
      %s84 = sphi 0, %s81
      %s85 = sphi 0, %s84
      %s101 = sphi 0, %s85
      %s109 = sphi 0, %s111
      %s112 = sphi 0, %s109
      %s113 = sphi 0, %s112
      %s129 = sphi 0, %s113
    $region4: #{tpu_custom_call.1} parent=1 // loop_header_branch
      %15 = sbr.rel (%p13) target = $region8
    $region5: #{tpu_custom_call.1} parent=1 // loop_body
      %s17 = ssub.s32 %s12, 1
      %s18 = ssub.s32 %s12, 2
      %s25 = sadd.s32 1, %s20
      %p26 = scmp.ge.s32.totalorder %s25, 2
      %s27 = scalar_select %p26, 0, %s25
      %s28 = sadd.s32 1, %s19
      %s29 = scalar_select %p26, %s28, %s19
      %p30 = scmp.ge.s32.totalorder %s29, 2
      %s31 = scalar_select %p30, 0, %s29
      %s33 = sadd.s32 %s32, 1
      %p36 = scmp.eq.s32.totalorder %s12, 3
      %p37 = scmp.ne.s32.totalorder %s32, %s34
      %p38 = scmp.eq.s32.totalorder %s12, 0
      %p39 = por %p37, %p38
      %p40 = scmp.ne.s32.totalorder %s32, %s34
      %p41 = scmp.eq.s32.totalorder %s17, 3
      %p42 = por %p40, %p41
      %p43 = scmp.ne.s32.totalorder %s34, %s35
      %p44 = scmp.eq.s32.totalorder %s17, 0
      %p45 = por %p43, %p44
      %p46 = scmp.ne.s32.totalorder %s34, %s35
      %p47 = scmp.eq.s32.totalorder %s18, 3
      %p48 = por %p46, %p47
      %p50 = scmp.ne.s32.totalorder %s35, %s49
      %p51 = scmp.eq.s32.totalorder %s18, 0
      %p52 = por %p50, %p51
      %s53 = ssub.s32 %s19, %s31
      %p54 = scmp.eq.s32.totalorder %s53, 0
      %s56 = sadd.s32 %s55, 1
      %s57 = scalar_select %p54, %s55, %s56
      %p60 = pneg %p54
      %p61 = scmp.eq.s32.totalorder %s12, 3
      %p62 = por %p60, %p61
      %p63 = scmp.ne.s32.totalorder %s55, %s58
      %p64 = scmp.eq.s32.totalorder %s12, 0
      %p65 = por %p63, %p64
      %p66 = scmp.ne.s32.totalorder %s55, %s58
      %p67 = scmp.eq.s32.totalorder %s17, 3
      %p68 = por %p66, %p67
      %p69 = scmp.ne.s32.totalorder %s58, %s59
      %p70 = scmp.eq.s32.totalorder %s17, 0
      %p71 = por %p69, %p70
      %p72 = scmp.ne.s32.totalorder %s58, %s59
      %p73 = scmp.eq.s32.totalorder %s18, 3
      %p74 = por %p72, %p73
      %p76 = scmp.ne.s32.totalorder %s59, %s75
      %p77 = scmp.eq.s32.totalorder %s18, 0
      %p78 = por %p76, %p77
      %s79 = ssub.s32 %s19, %s31
      %p80 = scmp.eq.s32.totalorder %s79, 0
      %s82 = sadd.s32 %s81, 1
      %s83 = scalar_select %p80, %s81, %s82
      %p86 = pneg %p80
      %p87 = scmp.eq.s32.totalorder %s12, 3
      %p88 = por %p86, %p87
      %p89 = scmp.ne.s32.totalorder %s81, %s84
      %p90 = scmp.eq.s32.totalorder %s12, 0
      %p91 = por %p89, %p90
      %p92 = scmp.ne.s32.totalorder %s81, %s84
      %p93 = scmp.eq.s32.totalorder %s17, 3
      %p94 = por %p92, %p93
      %p95 = scmp.ne.s32.totalorder %s84, %s85
      %p96 = scmp.eq.s32.totalorder %s17, 0
      %p97 = por %p95, %p96
      %p98 = scmp.ne.s32.totalorder %s84, %s85
      %p99 = scmp.eq.s32.totalorder %s18, 3
      %p100 = por %p98, %p99
      %p102 = scmp.ne.s32.totalorder %s85, %s101
      %p103 = scmp.eq.s32.totalorder %s18, 0
      %p104 = por %p102, %p103
      %s105 = ssub.s32 %s19, %s31
      %s106 = ssub.s32 %s20, %s27
      %s107 = sor.u32 %s105, %s106
      %p108 = scmp.eq.s32.totalorder %s107, 0
      %s110 = sadd.s32 %s109, 1
      %s111 = scalar_select %p108, %s109, %s110
      %p114 = pneg %p108
      %p115 = scmp.eq.s32.totalorder %s12, 3
      %p116 = por %p114, %p115
      %p117 = scmp.ne.s32.totalorder %s109, %s112
      %p118 = scmp.eq.s32.totalorder %s12, 0
      %p119 = por %p117, %p118
      %p120 = scmp.ne.s32.totalorder %s109, %s112
      %p121 = scmp.eq.s32.totalorder %s17, 3
      %p122 = por %p120, %p121
      %p123 = scmp.ne.s32.totalorder %s112, %s113
      %p124 = scmp.eq.s32.totalorder %s17, 0
      %p125 = por %p123, %p124
      %p126 = scmp.ne.s32.totalorder %s112, %s113
      %p127 = scmp.eq.s32.totalorder %s18, 3
      %p128 = por %p126, %p127
      %p130 = scmp.ne.s32.totalorder %s113, %s129
      %p131 = scmp.eq.s32.totalorder %s18, 0
      %p132 = por %p130, %p131
      %p133 = scmp.le.s32.totalorder 1, %s12
      %p134 = scmp.lt.s32.totalorder %s12, 5
      %p135 = pnand %p133, %p134
      %p136 = pneg %p135
      // Predicated region
      $region9: #{tpu_custom_call.1} parent=5 // pred_check
        _
      $region10: #{tpu_custom_call.1} parent=5 // pred_check_branch
        %138 = sbr.rel (%p135) target = $region12
      $region11: #{tpu_custom_call.1} parent=5 // pred_region
        %s139 = ssub.s32 %s12, 1
        // Predicated region
        $region13: #{tpu_custom_call.1} parent=11 // pred_check
          %p140 = pneg %p45
        $region14: #{tpu_custom_call.1} parent=11 // pred_check_branch
          %142 = sbr.rel (%p140) target = $region16
        $region15: #{tpu_custom_call.1} parent=11 // pred_region
          _
        $region16: #{tpu_custom_call.1} parent=11 // pred_fallthru
          _
      $region12: #{tpu_custom_call.1} parent=5 // pred_fallthru
        _
      %p143 = scmp.lt.s32.totalorder %s12, 4
      // Predicated region
      $region17: #{tpu_custom_call.1} parent=5 // pred_check
        %p144 = pneg %p143
      $region18: #{tpu_custom_call.1} parent=5 // pred_check_branch
        %146 = sbr.rel (%p144) target = $region20
      $region19: #{tpu_custom_call.1} parent=5 // pred_region
        // Predicated region
        $region21: #{tpu_custom_call.1} parent=19 // pred_check
          %p147 = pneg %p65
        $region22: #{tpu_custom_call.1} parent=19 // pred_check_branch
          %149 = sbr.rel (%p147) target = $region24
        $region23: #{tpu_custom_call.1} parent=19 // pred_region
          %p150 = scmp.lt.s32.totalorder %s19, 1
          %s151 = scalar_select %p150, %s19, 1
          %s152 = smul.addr %s151, 2
          %s153 = smul.addr %s152, 4
          %s154 = scalar_lea.vmem %s1, %s153
        $region24: #{tpu_custom_call.1} parent=19 // pred_fallthru
          _
        // Predicated region
        $region25: #{tpu_custom_call.1} parent=19 // pred_check
          %p155 = pneg %p91
        $region26: #{tpu_custom_call.1} parent=19 // pred_check_branch
          %157 = sbr.rel (%p155) target = $region28
        $region27: #{tpu_custom_call.1} parent=19 // pred_region
          %p158 = scmp.lt.s32.totalorder %s19, 1
          %s159 = scalar_select %p158, %s19, 1
          %s160 = smul.addr %s159, 2
          %s161 = smul.addr %s160, 8
          %s162 = scalar_lea.vmem %s2, %s161
        $region28: #{tpu_custom_call.1} parent=19 // pred_fallthru
          _
      $region20: #{tpu_custom_call.1} parent=5 // pred_fallthru
        _
      %p163 = scmp.le.s32.totalorder 1, %s12
      %p164 = scmp.lt.s32.totalorder %s12, 5
      %p165 = pnand %p163, %p164
      %p166 = pneg %p165
      // Predicated region
      $region29: #{tpu_custom_call.1} parent=5 // pred_check
        _
      $region30: #{tpu_custom_call.1} parent=5 // pred_check_branch
        %168 = sbr.rel (%p165) target = $region32
      $region31: #{tpu_custom_call.1} parent=5 // pred_region
        %s169 = ssub.s32 %s12, 1
        %p170 = pneg %p45
        %p171 = pneg %p42
        %p172 = scmp.lt.s32.totalorder %s21, 1
        %s173 = scalar_select %p172, %s21, 1
        %s174 = smul.addr %s173, 2
        %s175 = smul.addr %s174, 4
        %s176 = scalar_lea.vmem %s1, %s175
        %p177 = pneg %p71
        %p178 = pneg %p68
        %p179 = scmp.lt.s32.totalorder %s21, 1
        %s180 = scalar_select %p179, %s21, 1
        %s181 = smul.addr %s180, 2
        %s182 = smul.addr %s181, 8
        %s183 = scalar_lea.vmem %s2, %s182
        %p184 = pneg %p97
        %p185 = pneg %p94
        %p186 = pneg %p125
        %p187 = pneg %p122
        %s188 = sand.u32 %s112, 1
        %s189 = scalar_lea.sflag [#allocation4], %s188
        %s190 = sand.u32 %s112, 1
        %s191 = smul.addr %s190, 4
        %s192 = scalar_lea.vmem [#allocation3], %s191
        %p193 = scmp.lt.s32.totalorder %s21, 1
        %s194 = scalar_select %p193, %s21, 1
        %s195 = smul.addr %s194, 2
        %s196 = smul.addr %s195, 4
        %s197 = scalar_lea.vmem %s1, %s196
        %p198 = scmp.lt.s32.totalorder %s21, 1
        %s199 = scalar_select %p198, %s21, 1
        %s200 = smul.addr %s199, 2
        %s201 = smul.addr %s200, 8
        %s202 = scalar_lea.vmem %s2, %s201
        %p203 = scmp.eq.s32.totalorder %s22, 0
        // Predicated region
        $region33: #{tpu_custom_call.1} parent=31 // pred_check
          %p204 = pneg %p203
        $region34: #{tpu_custom_call.1} parent=31 // pred_check_branch
          %206 = sbr.rel (%p204) target = $region36
        $region35: #{tpu_custom_call.1} parent=31 // pred_region
          %v207 = vld [vmem:[%s0] sm:$0xf]
          %v208 = vld [vmem:[%s197] sm:$0xff]
          %v210 = vcombine.high %v208, %v208
          %vm211 = vcmask 31744
          %v213 = vsel %vm211, %v207, 0
          %vm215 = vcmask 1043456
          %v216 = vsel %vm215, %v208, 0
          %v218 = vsel %vm215, %v210, 0
          %220 = vmatprep.subr.mxu0 %v218
          %221 = vmatpush1.msra.mxu0 %v216
          %222 = vmatprep.subr.mxu0 0.0
          %223 = vmatpush1.msra.mxu0 0.0
          %224 = vmatprep.subr.mxu0 0.0
          %225 = vmatpush1.msra.mxu0 0.0
          %226 = vmatprep.subr.mxu0 0.0
          %227 = vmatpush1.msra.mxu0 0.0
          %228 = vmatprep.subr.mxu0 0.0
          %229 = vmatpush1.msra.mxu0 0.0
          %230 = vmatprep.subr.mxu0 0.0
          %231 = vmatpush1.msra.mxu0 0.0
          %232 = vmatprep.subr.mxu0 0.0
          %233 = vmatpush1.msra.mxu0 0.0
          %234 = vmatprep.subr.mxu0 0.0
          %235 = vmatpush1.msra.mxu0 0.0
          %236 = vmatprep.subr.mxu0 0.0
          %237 = vmatpush1.msra.mxu0 0.0
          %238 = vmatprep.subr.mxu0 0.0
          %239 = vmatpush1.msra.mxu0 0.0
          %240 = vmatprep.subr.mxu0 0.0
          %241 = vmatpush1.msra.mxu0 0.0
          %242 = vmatprep.subr.mxu0 0.0
          %243 = vmatpush1.msra.mxu0 0.0
          %244 = vmatprep.subr.mxu0 0.0
          %245 = vmatpush1.msra.mxu0 0.0
          %246 = vmatprep.subr.mxu0 0.0
          %247 = vmatpush1.msra.mxu0 0.0
          %248 = vmatprep.subr.mxu0 0.0
          %249 = vmatpush1.msra.mxu0 0.0
          %250 = vmatprep.subr.mxu0 0.0
          %251 = vmatpush1.msra.mxu0 0.0
          %252 = vmatprep.subr.mxu0 0.0
          %253 = vmatpush1.msra.mxu0 0.0
          %254 = vmatprep.subr.mxu0 0.0
          %255 = vmatpush1.msra.mxu0 0.0
          %256 = vmatprep.subr.mxu0 0.0
          %257 = vmatpush1.msra.mxu0 0.0
          %258 = vmatprep.subr.mxu0 0.0
          %259 = vmatpush1.msra.mxu0 0.0
          %260 = vmatprep.subr.mxu0 0.0
          %261 = vmatpush1.msra.mxu0 0.0
          %262 = vmatprep.subr.mxu0 0.0
          %263 = vmatpush1.msra.mxu0 0.0
          %264 = vmatprep.subr.mxu0 0.0
          %265 = vmatpush1.msra.mxu0 0.0
          %266 = vmatprep.subr.mxu0 0.0
          %267 = vmatpush1.msra.mxu0 0.0
          %268 = vmatprep.subr.mxu0 0.0
          %269 = vmatpush1.msra.mxu0 0.0
          %270 = vmatprep.subr.mxu0 0.0
          %271 = vmatpush1.msra.mxu0 0.0
          %272 = vmatprep.subr.mxu0 0.0
          %273 = vmatpush1.msra.mxu0 0.0
          %274 = vmatprep.subr.mxu0 0.0
          %275 = vmatpush1.msra.mxu0 0.0
          %276 = vmatprep.subr.mxu0 0.0
          %277 = vmatpush1.msra.mxu0 0.0
          %278 = vmatprep.subr.mxu0 0.0
          %279 = vmatpush1.msra.mxu0 0.0
          %280 = vmatprep.subr.mxu0 0.0
          %281 = vmatpush1.msra.mxu0 0.0
          %282 = vmatprep.subr.mxu0 0.0
          %283 = vmatpush1.msra.mxu0 0.0
          %284 = vmatprep.mubr.f32.mxu0 0.0
          %285 = vmatmul.mubr.f32.gmra.mrb[0].mxu0 %v213
          %v286 = vpop.f32.mrb[0].mxu0
          %v287 = vadd.f32 0.0, %v286
          %v288 = vpop.f32.mrb[0].mxu0
          %v289 = vadd.f32 0.0, %v288
          %290 = vdwg.mxu0
          %v291 = vmul.f32 %v287, %v287
          %v292 = vmul.f32 %v289, %v289
          %v293 = vsel %vm215, %v291, 0.0
          %v294 = vrot.slane %v293, 4
          %v295 = vadd.f32 %v293, %v294
          %v296 = vrot.slane %v295, 2
          %v297 = vadd.f32 %v295, %v296
          %v298 = vrot.slane %v297, 1
          %v299 = vadd.f32 %v297, %v298
          %v300 = vsel %vm215, %v292, 0.0
          %v301 = vrot.slane %v300, 4
          %v302 = vadd.f32 %v300, %v301
          %v303 = vrot.slane %v302, 2
          %v304 = vadd.f32 %v302, %v303
          %v305 = vrot.slane %v304, 1
          %v306 = vadd.f32 %v304, %v305
          %v307 = vrsqrt.pop %v299
          %v308 = vmul.f32 %v299, %v307
          %vm309 = vcmp.eq.f32.partialorder %v299, inf
          %v310 = vsel %vm309, %v299, %v308
          %vm311 = vcmp.eq.f32.partialorder %v299, 0.0
          %v312 = vand.u32 %v299, 2147483648
          %v313 = vsel %vm311, %v312, %v310
          %v314 = vrsqrt.pop %v306
          %v315 = vmul.f32 %v306, %v314
          %vm316 = vcmp.eq.f32.partialorder %v306, inf
          %v317 = vsel %vm316, %v306, %v315
          %vm318 = vcmp.eq.f32.partialorder %v306, 0.0
          %v319 = vand.u32 %v306, 2147483648
          %v320 = vsel %vm318, %v319, %v317
          %v321 = vadd.f32 %v313, 1e-05
          %v322 = vadd.f32 %v320, 1e-05
          %v323 = vrcp.pop %v321
          %v324 = vrcp.pop %v322
          %v325 = vmul.f32 %v287, %v323
          %v326 = vmul.f32 %v289, %v324
          %v329 = vcombine.low %v325, %v326
          %331 = vst [vmem:[#allocation2] sm:$0xff] %v329
        $region36: #{tpu_custom_call.1} parent=31 // pred_fallthru
          _
        %s332 = smul.u32 %s22, 128
        %s333 = sshra.s32 %s332, 7
        %s334 = sand.u32 %s332, 127
        %s335 = smul.addr %s333, 4
        %s336 = scalar_lea.vmem [#allocation2], %s335
        %v337 = vld [vmem:[%s336] sm:$0xf]
        loop: start=0, step=1, limit=2
        $region37: #{tpu_custom_call.1} parent=31 // loop_pre_header
          _
        $region38: #{tpu_custom_call.1} parent=31 // loop_header
          %s339 = sphi 0, %s343
          %p340 = scmp.ge.s32.totalorder %s339, 2
          %v344 = vphi 0.0, %v670
        $region39: #{tpu_custom_call.1} parent=31 // loop_header_branch
          %342 = sbr.rel (%p340) target = $region43
        $region40: #{tpu_custom_call.1} parent=31 // loop_body
          %s345 = smul.u32 %s339, 128
          %s346 = sshra.s32 %s345, 7
          %s347 = sand.u32 %s345, 127
          %s348 = smul.addr %s346, 4
          %s349 = scalar_lea.vmem [#allocation2], %s348
          %v350 = vld [vmem:[%s349] sm:$0xf]
          %351 = vxpose.xlu0.b32.start [1/16] %v350, 128
          %352 = vxpose.xlu0.b32.cont [2/16] 0.0, 128
          %353 = vxpose.xlu0.b32.cont [3/16] 0.0, 128
          %354 = vxpose.xlu0.b32.cont [4/16] 0.0, 128
          %355 = vxpose.xlu0.b32.cont [5/16] 0.0, 128
          %356 = vxpose.xlu0.b32.cont [6/16] 0.0, 128
          %357 = vxpose.xlu0.b32.cont [7/16] 0.0, 128
          %358 = vxpose.xlu0.b32.cont [8/16] 0.0, 128
          %359 = vxpose.xlu0.b32.cont [9/16] 0.0, 128
          %360 = vxpose.xlu0.b32.cont [10/16] 0.0, 128
          %361 = vxpose.xlu0.b32.cont [11/16] 0.0, 128
          %362 = vxpose.xlu0.b32.cont [12/16] 0.0, 128
          %363 = vxpose.xlu0.b32.cont [13/16] 0.0, 128
          %364 = vxpose.xlu0.b32.cont [14/16] 0.0, 128
          %365 = vxpose.xlu0.b32.cont [15/16] 0.0, 128
          %366 = vxpose.xlu0.b32.end [16/16] 0.0, 128
          %v367 = vpop.trf.xlu0
          %v368 = vpop.trf.xlu0
          %v369 = vpop.trf.xlu0
          %v370 = vpop.trf.xlu0
          %v371 = vpop.trf.xlu0
          %v372 = vpop.trf.xlu0
          %v373 = vpop.trf.xlu0
          %v374 = vpop.trf.xlu0
          %v375 = vpop.trf.xlu0
          %v376 = vpop.trf.xlu0
          %v377 = vpop.trf.xlu0
          %v378 = vpop.trf.xlu0
          %v379 = vpop.trf.xlu0
          %v380 = vpop.trf.xlu0
          %v381 = vpop.trf.xlu0
          %v382 = vpop.trf.xlu0
          %vm383 = vcmask 31744
          %v385 = vsel %vm383, %v367, 0
          %v388 = vsel %vm383, %v368, 0
          %v391 = vsel %vm383, %v369, 0
          %v394 = vsel %vm383, %v370, 0
          %v397 = vsel %vm383, %v371, 0
          %v400 = vsel %vm383, %v372, 0
          %v403 = vsel %vm383, %v373, 0
          %v406 = vsel %vm383, %v374, 0
          %v409 = vsel %vm383, %v375, 0
          %v412 = vsel %vm383, %v376, 0
          %v415 = vsel %vm383, %v377, 0
          %v418 = vsel %vm383, %v378, 0
          %v421 = vsel %vm383, %v379, 0
          %v424 = vsel %vm383, %v380, 0
          %v427 = vsel %vm383, %v381, 0
          %v430 = vsel %vm383, %v382, 0
          %vm432 = vcmask 1043456
          %v434 = vsel %vm432, %v337, 0
          %436 = vmatprep.subr.mxu0 0.0
          %437 = vmatpush1.msra.mxu0 %v434
          %438 = vmatprep.subr.mxu0 0.0
          %439 = vmatpush1.msra.mxu0 0.0
          %440 = vmatprep.subr.mxu0 0.0
          %441 = vmatpush1.msra.mxu0 0.0
          %442 = vmatprep.subr.mxu0 0.0
          %443 = vmatpush1.msra.mxu0 0.0
          %444 = vmatprep.subr.mxu0 0.0
          %445 = vmatpush1.msra.mxu0 0.0
          %446 = vmatprep.subr.mxu0 0.0
          %447 = vmatpush1.msra.mxu0 0.0
          %448 = vmatprep.subr.mxu0 0.0
          %449 = vmatpush1.msra.mxu0 0.0
          %450 = vmatprep.subr.mxu0 0.0
          %451 = vmatpush1.msra.mxu0 0.0
          %452 = vmatprep.subr.mxu0 0.0
          %453 = vmatpush1.msra.mxu0 0.0
          %454 = vmatprep.subr.mxu0 0.0
          %455 = vmatpush1.msra.mxu0 0.0
          %456 = vmatprep.subr.mxu0 0.0
          %457 = vmatpush1.msra.mxu0 0.0
          %458 = vmatprep.subr.mxu0 0.0
          %459 = vmatpush1.msra.mxu0 0.0
          %460 = vmatprep.subr.mxu0 0.0
          %461 = vmatpush1.msra.mxu0 0.0
          %462 = vmatprep.subr.mxu0 0.0
          %463 = vmatpush1.msra.mxu0 0.0
          %464 = vmatprep.subr.mxu0 0.0
          %465 = vmatpush1.msra.mxu0 0.0
          %466 = vmatprep.subr.mxu0 0.0
          %467 = vmatpush1.msra.mxu0 0.0
          %468 = vmatprep.subr.mxu0 0.0
          %469 = vmatpush1.msra.mxu0 0.0
          %470 = vmatprep.subr.mxu0 0.0
          %471 = vmatpush1.msra.mxu0 0.0
          %472 = vmatprep.subr.mxu0 0.0
          %473 = vmatpush1.msra.mxu0 0.0
          %474 = vmatprep.subr.mxu0 0.0
          %475 = vmatpush1.msra.mxu0 0.0
          %476 = vmatprep.subr.mxu0 0.0
          %477 = vmatpush1.msra.mxu0 0.0
          %478 = vmatprep.subr.mxu0 0.0
          %479 = vmatpush1.msra.mxu0 0.0
          %480 = vmatprep.subr.mxu0 0.0
          %481 = vmatpush1.msra.mxu0 0.0
          %482 = vmatprep.subr.mxu0 0.0
          %483 = vmatpush1.msra.mxu0 0.0
          %484 = vmatprep.subr.mxu0 0.0
          %485 = vmatpush1.msra.mxu0 0.0
          %486 = vmatprep.subr.mxu0 0.0
          %487 = vmatpush1.msra.mxu0 0.0
          %488 = vmatprep.subr.mxu0 0.0
          %489 = vmatpush1.msra.mxu0 0.0
          %490 = vmatprep.subr.mxu0 0.0
          %491 = vmatpush1.msra.mxu0 0.0
          %492 = vmatprep.subr.mxu0 0.0
          %493 = vmatpush1.msra.mxu0 0.0
          %494 = vmatprep.subr.mxu0 0.0
          %495 = vmatpush1.msra.mxu0 0.0
          %496 = vmatprep.subr.mxu0 0.0
          %497 = vmatpush1.msra.mxu0 0.0
          %498 = vmatprep.subr.mxu0 0.0
          %499 = vmatpush1.msra.mxu0 0.0
          %500 = vmatprep.mubr.f32.mxu0 0.0
          %501 = vmatmul.mubr.f32.gmra.mrb[0].mxu0 %v385
          %v502 = vpop.f32.mrb[0].mxu0
          %v503 = vadd.f32 0.0, %v502
          %v504 = vpop.f32.mrb[0].mxu0
          %505 = vmatprep.mubr.f32.mxu0 0.0
          %506 = vmatmul.mubr.f32.gmra.mrb[0].mxu0 %v388
          %v507 = vpop.f32.mrb[0].mxu0
          %v508 = vadd.f32 0.0, %v507
          %v509 = vpop.f32.mrb[0].mxu0
          %510 = vmatprep.mubr.f32.mxu0 0.0
          %511 = vmatmul.mubr.f32.gmra.mrb[0].mxu0 %v391
          %v512 = vpop.f32.mrb[0].mxu0
          %v513 = vadd.f32 0.0, %v512
          %v514 = vpop.f32.mrb[0].mxu0
          %515 = vmatprep.mubr.f32.mxu0 0.0
          %516 = vmatmul.mubr.f32.gmra.mrb[0].mxu0 %v394
          %v517 = vpop.f32.mrb[0].mxu0
          %v518 = vadd.f32 0.0, %v517
          %v519 = vpop.f32.mrb[0].mxu0
          %520 = vmatprep.mubr.f32.mxu0 0.0
          %521 = vmatmul.mubr.f32.gmra.mrb[0].mxu0 %v397
          %v522 = vpop.f32.mrb[0].mxu0
          %v523 = vadd.f32 0.0, %v522
          %v524 = vpop.f32.mrb[0].mxu0
          %525 = vmatprep.mubr.f32.mxu0 0.0
          %526 = vmatmul.mubr.f32.gmra.mrb[0].mxu0 %v400
          %v527 = vpop.f32.mrb[0].mxu0
          %v528 = vadd.f32 0.0, %v527
          %v529 = vpop.f32.mrb[0].mxu0
          %530 = vmatprep.mubr.f32.mxu0 0.0
          %531 = vmatmul.mubr.f32.gmra.mrb[0].mxu0 %v403
          %v532 = vpop.f32.mrb[0].mxu0
          %v533 = vadd.f32 0.0, %v532
          %v534 = vpop.f32.mrb[0].mxu0
          %535 = vmatprep.mubr.f32.mxu0 0.0
          %536 = vmatmul.mubr.f32.gmra.mrb[0].mxu0 %v406
          %v537 = vpop.f32.mrb[0].mxu0
          %v538 = vadd.f32 0.0, %v537
          %v539 = vpop.f32.mrb[0].mxu0
          %540 = vmatprep.mubr.f32.mxu0 0.0
          %541 = vmatmul.mubr.f32.gmra.mrb[0].mxu0 %v409
          %v542 = vpop.f32.mrb[0].mxu0
          %v543 = vadd.f32 0.0, %v542
          %v544 = vpop.f32.mrb[0].mxu0
          %545 = vmatprep.mubr.f32.mxu0 0.0
          %546 = vmatmul.mubr.f32.gmra.mrb[0].mxu0 %v412
          %v547 = vpop.f32.mrb[0].mxu0
          %v548 = vadd.f32 0.0, %v547
          %v549 = vpop.f32.mrb[0].mxu0
          %550 = vmatprep.mubr.f32.mxu0 0.0
          %551 = vmatmul.mubr.f32.gmra.mrb[0].mxu0 %v415
          %v552 = vpop.f32.mrb[0].mxu0
          %v553 = vadd.f32 0.0, %v552
          %v554 = vpop.f32.mrb[0].mxu0
          %555 = vmatprep.mubr.f32.mxu0 0.0
          %556 = vmatmul.mubr.f32.gmra.mrb[0].mxu0 %v418
          %v557 = vpop.f32.mrb[0].mxu0
          %v558 = vadd.f32 0.0, %v557
          %v559 = vpop.f32.mrb[0].mxu0
          %560 = vmatprep.mubr.f32.mxu0 0.0
          %561 = vmatmul.mubr.f32.gmra.mrb[0].mxu0 %v421
          %v562 = vpop.f32.mrb[0].mxu0
          %v563 = vadd.f32 0.0, %v562
          %v564 = vpop.f32.mrb[0].mxu0
          %565 = vmatprep.mubr.f32.mxu0 0.0
          %566 = vmatmul.mubr.f32.gmra.mrb[0].mxu0 %v424
          %v567 = vpop.f32.mrb[0].mxu0
          %v568 = vadd.f32 0.0, %v567
          %v569 = vpop.f32.mrb[0].mxu0
          %570 = vmatprep.mubr.f32.mxu0 0.0
          %571 = vmatmul.mubr.f32.gmra.mrb[0].mxu0 %v427
          %v572 = vpop.f32.mrb[0].mxu0
          %v573 = vadd.f32 0.0, %v572
          %v574 = vpop.f32.mrb[0].mxu0
          %575 = vmatprep.mubr.f32.mxu0 0.0
          %576 = vmatmul.mubr.f32.gmra.mrb[0].mxu0 %v430
          %v577 = vpop.f32.mrb[0].mxu0
          %v578 = vadd.f32 0.0, %v577
          %v579 = vpop.f32.mrb[0].mxu0
          %580 = vdwg.mxu0
          %v581 = vmax.f32 %v503, 0.0
          %v582 = vmax.f32 %v508, 0.0
          %v583 = vmax.f32 %v513, 0.0
          %v584 = vmax.f32 %v518, 0.0
          %v585 = vmax.f32 %v523, 0.0
          %v586 = vmax.f32 %v528, 0.0
          %v587 = vmax.f32 %v533, 0.0
          %v588 = vmax.f32 %v538, 0.0
          %v589 = vmax.f32 %v543, 0.0
          %v590 = vmax.f32 %v548, 0.0
          %v591 = vmax.f32 %v553, 0.0
          %v592 = vmax.f32 %v558, 0.0
          %v593 = vmax.f32 %v563, 0.0
          %v594 = vmax.f32 %v568, 0.0
          %v595 = vmax.f32 %v573, 0.0
          %v596 = vmax.f32 %v578, 0.0
          %s597 = smul.addr %s346, 8
          %s598 = scalar_lea.vmem %s202, %s597
          %v599 = vld [vmem:[%s598] sm:$0x1f]
          %600 = vmatprep.subr.mxu0 0.0
          %601 = vmatpush1.msra.mxu0 %v581
          %602 = vmatprep.subr.mxu0 0.0
          %603 = vmatpush1.msra.mxu0 %v582
          %604 = vmatprep.subr.mxu0 0.0
          %605 = vmatpush1.msra.mxu0 %v583
          %606 = vmatprep.subr.mxu0 0.0
          %607 = vmatpush1.msra.mxu0 %v584
          %608 = vmatprep.subr.mxu0 0.0
          %609 = vmatpush1.msra.mxu0 %v585
          %610 = vmatprep.subr.mxu0 0.0
          %611 = vmatpush1.msra.mxu0 %v586
          %612 = vmatprep.subr.mxu0 0.0
          %613 = vmatpush1.msra.mxu0 %v587
          %614 = vmatprep.subr.mxu0 0.0
          %615 = vmatpush1.msra.mxu0 %v588
          %616 = vmatprep.subr.mxu0 0.0
          %617 = vmatpush1.msra.mxu0 %v589
          %618 = vmatprep.subr.mxu0 0.0
          %619 = vmatpush1.msra.mxu0 %v590
          %620 = vmatprep.subr.mxu0 0.0
          %621 = vmatpush1.msra.mxu0 %v591
          %622 = vmatprep.subr.mxu0 0.0
          %623 = vmatpush1.msra.mxu0 %v592
          %624 = vmatprep.subr.mxu0 0.0
          %625 = vmatpush1.msra.mxu0 %v593
          %626 = vmatprep.subr.mxu0 0.0
          %627 = vmatpush1.msra.mxu0 %v594
          %628 = vmatprep.subr.mxu0 0.0
          %629 = vmatpush1.msra.mxu0 %v595
          %630 = vmatprep.subr.mxu0 0.0
          %631 = vmatpush1.msra.mxu0 %v596
          %632 = vmatprep.subr.mxu0 0.0
          %633 = vmatpush1.msra.mxu0 0.0
          %634 = vmatprep.subr.mxu0 0.0
          %635 = vmatpush1.msra.mxu0 0.0
          %636 = vmatprep.subr.mxu0 0.0
          %637 = vmatpush1.msra.mxu0 0.0
          %638 = vmatprep.subr.mxu0 0.0
          %639 = vmatpush1.msra.mxu0 0.0
          %640 = vmatprep.subr.mxu0 0.0
          %641 = vmatpush1.msra.mxu0 0.0
          %642 = vmatprep.subr.mxu0 0.0
          %643 = vmatpush1.msra.mxu0 0.0
          %644 = vmatprep.subr.mxu0 0.0
          %645 = vmatpush1.msra.mxu0 0.0
          %646 = vmatprep.subr.mxu0 0.0
          %647 = vmatpush1.msra.mxu0 0.0
          %648 = vmatprep.subr.mxu0 0.0
          %649 = vmatpush1.msra.mxu0 0.0
          %650 = vmatprep.subr.mxu0 0.0
          %651 = vmatpush1.msra.mxu0 0.0
          %652 = vmatprep.subr.mxu0 0.0
          %653 = vmatpush1.msra.mxu0 0.0
          %654 = vmatprep.subr.mxu0 0.0
          %655 = vmatpush1.msra.mxu0 0.0
          %656 = vmatprep.subr.mxu0 0.0
          %657 = vmatpush1.msra.mxu0 0.0
          %658 = vmatprep.subr.mxu0 0.0
          %659 = vmatpush1.msra.mxu0 0.0
          %660 = vmatprep.subr.mxu0 0.0
          %661 = vmatpush1.msra.mxu0 0.0
          %662 = vmatprep.subr.mxu0 0.0
          %663 = vmatpush1.msra.mxu0 0.0
          %664 = vmatprep.mubr.f32.mxu0 0.0
          %665 = vmatmul.mubr.f32.gmra.mrb[0].mxu0 %v599
          %v666 = vpop.f32.mrb[0].mxu0
          %v667 = vadd.f32 0.0, %v666
          %v668 = vpop.f32.mrb[0].mxu0
          %669 = vdwg.mxu0
          %v670 = vadd.f32 %v344, %v667
        $region41: #{tpu_custom_call.1} parent=31 // loop_footer
          %s343 = sadd.s32 1, %s339
        $region42: #{tpu_custom_call.1} parent=31 // loop_footer_branch
          %338 = sbr.rel target = $region38
        $region43: #{tpu_custom_call.1} parent=31 // loop_exit
          _
        %v671 = vadd.f32 %v344, 1e-05
        %v672 = vrcp.pop %v671
        %v673 = vlaneseq
        %v674 = vshrl.u32 %v673, 7
        %v675 = vsub.s32 4, %v674
        %v676 = vrot.slane %v672, %v675
        %v677 = vmul.f32 %v344, %v676
        %678 = vst [vmem:[%s192] sm:$0xf] %v677
        %s679 = sand.u32 %s112, 1
        %s680 = scalar_lea.sflag [#allocation4], %s679
        %s681 = sand.u32 %s112, 1
        %s682 = smul.addr %s681, 4
        %s683 = scalar_lea.vmem [#allocation3], %s682
        // Predicated region
        $region44: #{tpu_custom_call.1} parent=31 // pred_check
          %p684 = pneg %p122
        $region45: #{tpu_custom_call.1} parent=31 // pred_check_branch
          %686 = sbr.rel (%p684) target = $region47
        $region46: #{tpu_custom_call.1} parent=31 // pred_region
          %s688 = ssub.s32 64, 64
          %689 = vsyncadd %s680, %s688
          %s690 = smul.addr %s21, 2
          %s691 = sadd.s32 %s22, %s690
          %s692 = smul.addr %s691, 64
          %s693 = scalar_lea.hbm %s3, %s692
          %s695 = sshll.u32 %s683, 4
          %s696 = int_to_ptr.vmem [resolvable:$true] %s695
          %698 = dma.vmem_to_hbm [thread:$0]  %s696, 64, %s693, %s680
        $region47: #{tpu_custom_call.1} parent=31 // pred_fallthru
          _
      $region32: #{tpu_custom_call.1} parent=5 // pred_fallthru
        _
      %p699 = scmp.le.s32.totalorder 2, %s12
      // Predicated region
      $region48: #{tpu_custom_call.1} parent=5 // pred_check
        %p700 = pneg %p699
      $region49: #{tpu_custom_call.1} parent=5 // pred_check_branch
        %702 = sbr.rel (%p700) target = $region51
      $region50: #{tpu_custom_call.1} parent=5 // pred_region
        %s703 = ssub.s32 %s12, 2
        // Predicated region
        $region52: #{tpu_custom_call.1} parent=50 // pred_check
          %p704 = pneg %p128
        $region53: #{tpu_custom_call.1} parent=50 // pred_check_branch
          %706 = sbr.rel (%p704) target = $region55
        $region54: #{tpu_custom_call.1} parent=50 // pred_region
          %s707 = sand.u32 %s113, 1
          %s708 = scalar_lea.sflag [#allocation4], %s707
          %s709 = sand.u32 %s113, 1
          %s710 = smul.addr %s709, 4
          %s711 = scalar_lea.vmem [#allocation3], %s710
          %712 = dma.done %s708, 64
        $region55: #{tpu_custom_call.1} parent=50 // pred_fallthru
          _
      $region51: #{tpu_custom_call.1} parent=5 // pred_fallthru
        _
    $region6: #{tpu_custom_call.1} parent=1 // loop_footer
      %s16 = sadd.s32 1, %s12
    $region7: #{tpu_custom_call.1} parent=1 // loop_footer_branch
      %11 = sbr.rel target = $region3
    $region8: #{tpu_custom_call.1} parent=1 // loop_exit
      _
    %713 = vsyncpa [#allocation4], 1
    %s714 = scalar_lea.sflag [#allocation4], 1
    %715 = vsyncpa %s714, 1

</llo_original>
